<compile_context>
chip_gen: v7x
topology: tpu7x:2x2x1
jax: 0.10.0
libtpu: 0.0.40
codegen_flags: <defaults>
</compile_context>

<pallas_src>
import jax
import jax.numpy as jnp
from jax.experimental import pallas as pl
from jax.experimental.pallas import tpu as pltpu


def _round_up(x, m):
    return (x + m - 1) // m * m


def _fsp2d_kernel(x_ref, w_freq_ref, w_alphas_ref, o_ref):
    # First matmul on the MXU with f32 accumulation.  x is cast to the
    # resident weight dtype in-register (no-op on the pure-f32 path; the
    # bf16 cast lives here instead of as a separate HBM pass in the wrapper).
    x = x_ref[...].astype(w_freq_ref.dtype)
    freq = jnp.dot(x, w_freq_ref[...], preferred_element_type=jnp.float32)
    # cos always evaluated in f32 (accuracy; v5e has no bf16 VPU/EUP path).
    signals = jnp.cos(freq)
    out = jnp.dot(signals.astype(w_alphas_ref.dtype), w_alphas_ref[...],
                  preferred_element_type=jnp.float32)
    o_ref[...] = out.astype(o_ref.dtype)


def _pick_pack(hm):
    """Smallest pack factor P in {1,2,4,8} with P*hm a multiple of 128 lanes."""
    for p in (1, 2, 4, 8):
        if (p * hm) % 128 == 0:
            return p
    # Fallback: no small pack makes the output lane-dense; write the true
    # hm-wide output (masked stores beat 4x-padded writes when HBM-bound).
    return 1


def _pack_weights(w_freq, w_alphas, pack, dtype):
    """Pre-transpose and build block-diagonal packed weights.

    NOTE(perf): in production these packed weights should be built once at
    parameter-prep time (they are only a few hundred KiB), not per call.
    """
    w_freq_t = jnp.transpose(w_freq).astype(dtype)      # (k, n)
    w_alphas_t = jnp.transpose(w_alphas).astype(dtype)  # (n, hm)
    if pack == 1:
        return w_freq_t, w_alphas_t
    eye = jnp.eye(pack, dtype=dtype)
    w_freq_bd = jnp.kron(eye, w_freq_t)      # (P*k, P*n)  block diagonal
    w_alphas_bd = jnp.kron(eye, w_alphas_t)  # (P*n, P*hm) block diagonal
    return w_freq_bd, w_alphas_bd


def fsp_2d_forward(x, w_freq, w_alphas, heads_n, heads_m, *,
                   block_rows=8192, compute_dtype=None):
    """Pallas implementation of FSP_2D.forward.

    Args:
      x:             (B, k) input.
      w_freq:        (n, k) weight of nn.Linear(k, n, bias=False) (PyTorch layout).
      w_alphas:      (heads_n*heads_m, n) weight of nn.Linear(n, heads_n*heads_m).
      block_rows:    batch tile size in ORIGINAL rows per grid step.
      compute_dtype: MXU operand dtype (e.g. jnp.bfloat16).  Weights are
                     stored in this dtype; x is cast in-kernel.  Accumulation
                     and cos stay f32.
    Returns:
      (B, heads_n, heads_m) array in x.dtype.
    """
    B, k = x.shape
    n, k2 = w_freq.shape
    assert k2 == k
    hm = heads_n * heads_m
    assert w_alphas.shape == (hm, n)
    out_dtype = x.dtype
    wdtype = x.dtype if compute_dtype is None else compute_dtype

    pack = _pick_pack(hm)
    w_freq_p, w_alphas_p = _pack_weights(w_freq, w_alphas, pack, wdtype)

    # Pack `pack` consecutive batch rows into one lane-dense row.  The
    # reshape is row-major contiguous, i.e. free.  Only if B is not a
    # multiple of the (small) pack factor do we pad a few rows.
    # TODO(synk): handle B % pack != 0 without the (rare) jnp.pad copy.
    Bpad = _round_up(B, pack)
    x_in = x if Bpad == B else jnp.pad(x, ((0, Bpad - B), (0, 0)))
    Bp = Bpad // pack
    xp = x_in.reshape(Bp, pack * k)

    # Batch tile in packed rows, rounded to the sublane packing of x's dtype.
    sub = {4: 8, 2: 16, 1: 32}.get(jnp.dtype(x.dtype).itemsize, 8)
    tb = max(1, block_rows // pack)
    if Bp > sub:
        # Keep >= 2 grid steps so ("parallel",) can use both TCs (v7x).
        tb = min(tb, _round_up(pl.cdiv(Bp, 2), sub))
    tb = _round_up(tb, sub)
    if tb > Bp:
        tb = Bp  # single block covering the whole (small) array, no padding
    grid = (pl.cdiv(Bp, tb),)

    out = pl.pallas_call(
        _fsp2d_kernel,
        out_shape=jax.ShapeDtypeStruct((Bp, pack * hm), out_dtype),
        grid=grid,
        in_specs=[
            pl.BlockSpec((tb, pack * k), lambda i: (i, 0)),         # streamed x
            pl.BlockSpec((pack * k, pack * n), lambda i: (0, 0)),   # resident W
            pl.BlockSpec((pack * n, pack * hm), lambda i: (0, 0)),  # resident W
        ],
        out_specs=pl.BlockSpec((tb, pack * hm), lambda i: (i, 0)),
        compiler_params=pltpu.CompilerParams(
            dimension_semantics=("parallel",)),
    )(xp, w_freq_p, w_alphas_p)

    out = out.reshape(Bpad, hm)         # free row-major un-pack
    if Bpad != B:
        out = out[:B]                   # contiguous row slice (rarely taken)
    return out.reshape(B, heads_n, heads_m)


def _ref_forward(x, w_freq, w_alphas, heads_n, heads_m):
    freq = x @ w_freq.T
    signals = jnp.cos(freq)
    out = signals @ w_alphas.T
    return out.reshape(x.shape[0], heads_n, heads_m)


if __name__ == "__main__":
    # FSP_2D(inout=(k, heads_n, heads_m), parameters=n)
    k = 32          # input feature dim
    n = 64          # number of frequencies (self.m)
    heads_n = 4
    heads_m = 8
    hm = heads_n * heads_m

    key = jax.random.PRNGKey(0)
    kx1, kw1, kw2, kx2 = jax.random.split(key, 4)

    # Deterministic init mimicking nn.Linear default: U(-1/sqrt(fan_in), +)
    bound1 = 1.0 / (k ** 0.5)
    w_freq = jax.random.uniform(kw1, (n, k), minval=-bound1, maxval=bound1,
                                dtype=jnp.float32)
    bound2 = 1.0 / (n ** 0.5)
    w_alphas = jax.random.uniform(kw2, (hm, n), minval=-bound2, maxval=bound2,
                                  dtype=jnp.float32)

    # Case 1: small batch, pure f32 path, single grid step, tight tolerance.
    B1 = 8
    x1 = jax.random.normal(kx1, (B1, k), dtype=jnp.float32)
    out1 = jax.block_until_ready(
        fsp_2d_forward(x1, w_freq, w_alphas, heads_n, heads_m))
    ref1 = _ref_forward(x1, w_freq, w_alphas, heads_n, heads_m)
    assert out1.shape == (B1, heads_n, heads_m)
    assert jnp.allclose(out1, ref1, atol=1e-5, rtol=1e-5), "f32 mismatch"

    # Case 2: multi-step grid with a ragged last block (B not a multiple of
    # the tile) + bf16 MXU operands (f32 streaming of x, in-kernel cast,
    # f32 accumulation, f32 cos).
    B2 = 40
    x2 = jax.random.normal(kx2, (B2, k), dtype=jnp.float32)
    out2 = jax.block_until_ready(
        fsp_2d_forward(x2, w_freq, w_alphas, heads_n, heads_m,
                       block_rows=32, compute_dtype=jnp.bfloat16))
    ref2 = _ref_forward(x2, w_freq, w_alphas, heads_n, heads_m)
    assert out2.shape == (B2, heads_n, heads_m)
    assert jnp.allclose(out2, ref2, atol=1e-1, rtol=1e-1), "bf16 mismatch"

    print("KERNEL_OK")
</pallas_src>

<mosaic_0001>
module attributes {stable_mosaic.version = 11 : i64} {
  func.func @_fsp2d_kernel(%arg0: i32, %arg1: memref<2x128xf32, #tpu.memory_space<vmem>>, %arg2: memref<128x256xf32, #tpu.memory_space<vmem>>, %arg3: memref<256x128xf32, #tpu.memory_space<vmem>>, %arg4: memref<2x128xf32, #tpu.memory_space<vmem>>) attributes {dimension_semantics = [#tpu.dimension_semantics<parallel>], iteration_bounds = array<i64: 1>, scalar_prefetch = 0 : i64, scratch_operands = 0 : i64, tpu.core_type = #tpu.core_type<tc>, window_params = [{transform_indices = @transform_0, window_bounds = array<i64: 2, 128>}, {pipeline_mode = #tpu.pipeline_mode<synchronous>, transform_indices = @transform_1, window_bounds = array<i64: 128, 256>}, {pipeline_mode = #tpu.pipeline_mode<synchronous>, transform_indices = @transform_2, window_bounds = array<i64: 256, 128>}, {transform_indices = @transform_3, window_bounds = array<i64: 2, 128>}]} {
    %c0 = arith.constant 0 : index
    %c0_0 = arith.constant 0 : index
    %0 = vector.load %arg1[%c0, %c0_0] : memref<2x128xf32, #tpu.memory_space<vmem>>, vector<2x128xf32>
    %c0_1 = arith.constant 0 : index
    %c0_2 = arith.constant 0 : index
    %1 = vector.load %arg2[%c0_1, %c0_2] : memref<128x256xf32, #tpu.memory_space<vmem>>, vector<128x256xf32>
    %cst = arith.constant dense<0.000000e+00> : vector<2x256xf32>
    %2 = tpu.matmul %0, %1, %cst {dimension_numbers = #tpu.dot_dimension_numbers<[1], [0], [0], [1], [0, 0, 1, 1], [], []>} : vector<2x128xf32>, vector<128x256xf32>, vector<2x256xf32> -> vector<2x256xf32>
    %3 = math.cos %2 : vector<2x256xf32>
    %c0_3 = arith.constant 0 : index
    %c0_4 = arith.constant 0 : index
    %4 = vector.load %arg3[%c0_3, %c0_4] : memref<256x128xf32, #tpu.memory_space<vmem>>, vector<256x128xf32>
    %cst_5 = arith.constant dense<0.000000e+00> : vector<2x128xf32>
    %5 = tpu.matmul %3, %4, %cst_5 {dimension_numbers = #tpu.dot_dimension_numbers<[1], [0], [0], [1], [0, 0, 1, 1], [], []>} : vector<2x256xf32>, vector<256x128xf32>, vector<2x128xf32> -> vector<2x128xf32>
    %c0_6 = arith.constant 0 : index
    %c0_7 = arith.constant 0 : index
    %6 = vector.load %arg4[%c0_6, %c0_7] : memref<2x128xf32, #tpu.memory_space<vmem>>, vector<2x128xf32>
    tpu.vector_store %arg4[%c0_6, %c0_7], %5 {strides = array<i32>} : memref<2x128xf32, #tpu.memory_space<vmem>>, vector<2x128xf32>,
    return
  }
  func.func @transform_0(%arg0: i32) -> (i32, i32) {
    %c0_i32 = arith.constant 0 : i32
    %c0_i32_0 = arith.constant 0 : i32
    return %arg0, %c0_i32 : i32, i32
  }
  func.func @transform_1(%arg0: i32) -> (i32, i32) {
    %c0_i32 = arith.constant 0 : i32
    %c0_i32_0 = arith.constant 0 : i32
    %c0_i32_1 = arith.constant 0 : i32
    return %c0_i32, %c0_i32_0 : i32, i32
  }
  func.func @transform_2(%arg0: i32) -> (i32, i32) {
    %c0_i32 = arith.constant 0 : i32
    %c0_i32_0 = arith.constant 0 : i32
    %c0_i32_1 = arith.constant 0 : i32
    return %c0_i32, %c0_i32_0 : i32, i32
  }
  func.func @transform_3(%arg0: i32) -> (i32, i32) {
    %c0_i32 = arith.constant 0 : i32
    %c0_i32_0 = arith.constant 0 : i32
    return %arg0, %c0_i32 : i32, i32
  }
}

</mosaic_0001>

<llo_original>
// kernel: tpu_custom_call.1
$region0: #{tpu_custom_call.1}
  #allocation0 [shape = 'u32[]', space=smem, size = 0x4, offset = 0x4, fixed_abs, tag = 'smem constant byte address 0x4 - core index']
  #allocation1 [shape = 'u32[144,128]{1,0:T(1,128)}', space=vmem, size = 0x12000, scoped, tag = 'internal scratch']
  %s0 = inlined_call_operand.hbm [shape: f32[2,128], index: 0, kind: input, shape index: {}]
  %s1 = inlined_call_operand.hbm [shape: f32[128,256], index: 1, kind: input, shape index: {}]
  %s2 = inlined_call_operand.hbm [shape: f32[256,128], index: 2, kind: input, shape index: {}]
  %s3 = inlined_call_operand.hbm [shape: f32[2,128], index: 3, kind: output, shape index: {}]
  %s4 = sld [smem:[#allocation0]]
  $region34: #{tpu_custom_call.1} parent=0
    _
  %s6 = ssub.s32 1, %s4
  %s7 = scalar_select 0, %s6, %s4
  $region1: #{tpu_custom_call.1} parent=0
    #allocation2 [shape = 'u8[1024]{0}', space=vmem, size = 0x400, scoped, tag = 'input window, operand 0, single buffered']
    #allocation3 [shape = 's32[1]{0}', space=sflag, size = 0x4, scoped, tag = 'scoped memory for tpu_custom_call.1']
    #allocation4 [shape = 's32[1]{0}', space=sflag, size = 0x4, scoped, tag = 'scoped memory for tpu_custom_call.1']
    #allocation5 [shape = 'u8[131072]{0}', space=vmem, size = 0x20000, scoped, tag = 'input window, operand 1, single buffered']
    #allocation6 [shape = 's32[1]{0}', space=sflag, size = 0x4, scoped, tag = 'scoped memory for tpu_custom_call.1']
    #allocation7 [shape = 'u8[131072]{0}', space=vmem, size = 0x20000, scoped, tag = 'input window, operand 2, single buffered']
    #allocation8 [shape = 'u8[1024]{0}', space=vmem, size = 0x400, scoped, tag = 'output window, operand 0, single buffered']
    %8 = vsyncpa [#allocation3], 0
    %9 = vsyncpa [#allocation6], 0
    %10 = vsyncpa [#allocation4], 0
    // Predicated region
    $region2: #{tpu_custom_call.1} parent=1 // pred_check
      _
    $region3: #{tpu_custom_call.1} parent=1 // pred_check_branch
      %12 = sbr.rel (0) target = $region5
    $region4: #{tpu_custom_call.1} parent=1 // pred_region
      %s14 = ssub.s32 32, 32
      %15 = vsyncadd [#allocation3], %s14
      %s17 = sshll.u32 [#allocation2], 4
      %s18 = int_to_ptr.vmem [resolvable:$true] %s17
      %20 = dma.hbm_to_vmem [thread:$0]  %s0, 32, %s18, [#allocation3]
    $region5: #{tpu_custom_call.1} parent=1 // pred_fallthru
      _
    // Predicated region
    $region6: #{tpu_custom_call.1} parent=1 // pred_check
      _
    $region7: #{tpu_custom_call.1} parent=1 // pred_check_branch
      %22 = sbr.rel (0) target = $region9
    $region8: #{tpu_custom_call.1} parent=1 // pred_region
      %s24 = ssub.s32 4096, 4096
      %25 = vsyncadd [#allocation6], %s24
      %s26 = sshll.u32 [#allocation5], 4
      %s27 = int_to_ptr.vmem [resolvable:$true] %s26
      %32 = dma.hbm_to_vmem [thread:$0]  %s1, 4096, %s27, [#allocation6], 256, 256, 16
    $region9: #{tpu_custom_call.1} parent=1 // pred_fallthru
      _
    // Predicated region
    $region10: #{tpu_custom_call.1} parent=1 // pred_check
      _
    $region11: #{tpu_custom_call.1} parent=1 // pred_check_branch
      %34 = sbr.rel (0) target = $region13
    $region12: #{tpu_custom_call.1} parent=1 // pred_region
      %s36 = ssub.s32 4096, 4096
      %37 = vsyncadd [#allocation6], %s36
      %s38 = sshll.u32 [#allocation7], 4
      %s39 = int_to_ptr.vmem [resolvable:$true] %s38
      %44 = dma.hbm_to_vmem [thread:$0]  %s2, 4096, %s39, [#allocation6], 128, 128, 8
    $region13: #{tpu_custom_call.1} parent=1 // pred_fallthru
      _
    // Predicated region
    $region14: #{tpu_custom_call.1} parent=1 // pred_check
      _
    $region15: #{tpu_custom_call.1} parent=1 // pred_check_branch
      %46 = sbr.rel (0) target = $region17
    $region16: #{tpu_custom_call.1} parent=1 // pred_region
      %47 = dma.done [#allocation3], 32
    $region17: #{tpu_custom_call.1} parent=1 // pred_fallthru
      _
    // Predicated region
    $region18: #{tpu_custom_call.1} parent=1 // pred_check
      _
    $region19: #{tpu_custom_call.1} parent=1 // pred_check_branch
      %49 = sbr.rel (0) target = $region21
    $region20: #{tpu_custom_call.1} parent=1 // pred_region
      %50 = dma.done [#allocation6], 4096
    $region21: #{tpu_custom_call.1} parent=1 // pred_fallthru
      _
    // Predicated region
    $region22: #{tpu_custom_call.1} parent=1 // pred_check
      _
    $region23: #{tpu_custom_call.1} parent=1 // pred_check_branch
      %52 = sbr.rel (0) target = $region25
    $region24: #{tpu_custom_call.1} parent=1 // pred_region
      %53 = dma.done [#allocation6], 4096
    $region25: #{tpu_custom_call.1} parent=1 // pred_fallthru
      _
    %v54 = vld [vmem:[#allocation2] sm:$0x3]
    %v55 = vld [vmem:[#allocation5] sm:$0xff]
    %v56 = vld [vmem:[#allocation5 + $0x8] sm:$0xff]
    %v57 = vld [vmem:[#allocation5 + $0x10] sm:$0xff]
    %v58 = vld [vmem:[#allocation5 + $0x18] sm:$0xff]
    %v59 = vld [vmem:[#allocation5 + $0x20] sm:$0xff]
    %v60 = vld [vmem:[#allocation5 + $0x28] sm:$0xff]
    %v61 = vld [vmem:[#allocation5 + $0x30] sm:$0xff]
    %v62 = vld [vmem:[#allocation5 + $0x38] sm:$0xff]
    %v63 = vld [vmem:[#allocation5 + $0x40] sm:$0xff]
    %v64 = vld [vmem:[#allocation5 + $0x48] sm:$0xff]
    %v65 = vld [vmem:[#allocation5 + $0x50] sm:$0xff]
    %v66 = vld [vmem:[#allocation5 + $0x58] sm:$0xff]
    %v67 = vld [vmem:[#allocation5 + $0x60] sm:$0xff]
    %v68 = vld [vmem:[#allocation5 + $0x68] sm:$0xff]
    %v69 = vld [vmem:[#allocation5 + $0x70] sm:$0xff]
    %v70 = vld [vmem:[#allocation5 + $0x78] sm:$0xff]
    %v71 = vld [vmem:[#allocation5 + $0x80] sm:$0xff]
    %v72 = vld [vmem:[#allocation5 + $0x88] sm:$0xff]
    %v73 = vld [vmem:[#allocation5 + $0x90] sm:$0xff]
    %v74 = vld [vmem:[#allocation5 + $0x98] sm:$0xff]
    %v75 = vld [vmem:[#allocation5 + $0xa0] sm:$0xff]
    %v76 = vld [vmem:[#allocation5 + $0xa8] sm:$0xff]
    %v77 = vld [vmem:[#allocation5 + $0xb0] sm:$0xff]
    %v78 = vld [vmem:[#allocation5 + $0xb8] sm:$0xff]
    %v79 = vld [vmem:[#allocation5 + $0xc0] sm:$0xff]
    %v80 = vld [vmem:[#allocation5 + $0xc8] sm:$0xff]
    %v81 = vld [vmem:[#allocation5 + $0xd0] sm:$0xff]
    %v82 = vld [vmem:[#allocation5 + $0xd8] sm:$0xff]
    %v83 = vld [vmem:[#allocation5 + $0xe0] sm:$0xff]
    %v84 = vld [vmem:[#allocation5 + $0xe8] sm:$0xff]
    %v85 = vld [vmem:[#allocation5 + $0xf0] sm:$0xff]
    %v86 = vld [vmem:[#allocation5 + $0xf8] sm:$0xff]
    %87 = vmatprep.subr.mxu0 %v56
    %88 = vmatpush1.msra.mxu0 %v55
    %89 = vmatprep.subr.mxu0 %v58
    %90 = vmatpush1.msra.mxu0 %v57
    %91 = vmatprep.subr.mxu0 %v60
    %92 = vmatpush1.msra.mxu0 %v59
    %93 = vmatprep.subr.mxu0 %v62
    %94 = vmatpush1.msra.mxu0 %v61
    %95 = vmatprep.subr.mxu0 %v64
    %96 = vmatpush1.msra.mxu0 %v63
    %97 = vmatprep.subr.mxu0 %v66
    %98 = vmatpush1.msra.mxu0 %v65
    %99 = vmatprep.subr.mxu0 %v68
    %100 = vmatpush1.msra.mxu0 %v67
    %101 = vmatprep.subr.mxu0 %v70
    %102 = vmatpush1.msra.mxu0 %v69
    %103 = vmatprep.subr.mxu0 %v72
    %104 = vmatpush1.msra.mxu0 %v71
    %105 = vmatprep.subr.mxu0 %v74
    %106 = vmatpush1.msra.mxu0 %v73
    %107 = vmatprep.subr.mxu0 %v76
    %108 = vmatpush1.msra.mxu0 %v75
    %109 = vmatprep.subr.mxu0 %v78
    %110 = vmatpush1.msra.mxu0 %v77
    %111 = vmatprep.subr.mxu0 %v80
    %112 = vmatpush1.msra.mxu0 %v79
    %113 = vmatprep.subr.mxu0 %v82
    %114 = vmatpush1.msra.mxu0 %v81
    %115 = vmatprep.subr.mxu0 %v84
    %116 = vmatpush1.msra.mxu0 %v83
    %117 = vmatprep.subr.mxu0 %v86
    %118 = vmatpush1.msra.mxu0 %v85
    %119 = vmatprep.subr.mxu0 0.0
    %120 = vmatpush1.msra.mxu0 0.0
    %121 = vmatprep.subr.mxu0 0.0
    %122 = vmatpush1.msra.mxu0 0.0
    %123 = vmatprep.subr.mxu0 0.0
    %124 = vmatpush1.msra.mxu0 0.0
    %125 = vmatprep.subr.mxu0 0.0
    %126 = vmatpush1.msra.mxu0 0.0
    %127 = vmatprep.subr.mxu0 0.0
    %128 = vmatpush1.msra.mxu0 0.0
    %129 = vmatprep.subr.mxu0 0.0
    %130 = vmatpush1.msra.mxu0 0.0
    %131 = vmatprep.subr.mxu0 0.0
    %132 = vmatpush1.msra.mxu0 0.0
    %133 = vmatprep.subr.mxu0 0.0
    %134 = vmatpush1.msra.mxu0 0.0
    %135 = vmatprep.subr.mxu0 0.0
    %136 = vmatpush1.msra.mxu0 0.0
    %137 = vmatprep.subr.mxu0 0.0
    %138 = vmatpush1.msra.mxu0 0.0
    %139 = vmatprep.subr.mxu0 0.0
    %140 = vmatpush1.msra.mxu0 0.0
    %141 = vmatprep.subr.mxu0 0.0
    %142 = vmatpush1.msra.mxu0 0.0
    %143 = vmatprep.subr.mxu0 0.0
    %144 = vmatpush1.msra.mxu0 0.0
    %145 = vmatprep.subr.mxu0 0.0
    %146 = vmatpush1.msra.mxu0 0.0
    %147 = vmatprep.subr.mxu0 0.0
    %148 = vmatpush1.msra.mxu0 0.0
    %149 = vmatprep.subr.mxu0 0.0
    %150 = vmatpush1.msra.mxu0 0.0
    %151 = vmatprep.mubr.f32.mxu0 0.0
    %152 = vmatmul.mubr.f32.gmra.mrb[0].mxu0 %v54
    %v153 = vpop.f32.mrb[0].mxu0
    %v154 = vadd.f32 0.0, %v153
    %v155 = vpop.f32.mrb[0].mxu0
    %v156 = vadd.f32 0.0, %v155
    %157 = vdwg.mxu0
    %v158 = vand.u32 2147483647, %v154
    %vm159 = vcmp.le.f32.partialorder %v158, 0.7853982
    %vm160 = vcmp.lt.s32.totalorder %v154, 0
    %v161 = vand.u32 %v154, 2139095040
    %v162 = vshrl.u32 %v161, 23
    %v163 = vsub.s32 %v162, 127
    %v164 = vand.u32 2147483647, %v154
    %v165 = vand.u32 %v164, 8388607
    %v166 = vor.u32 %v165, 8388608
    %v167 = vsub.s32 0, %v166
    %v168 = vadd.s32 %v163, 1
    %vm169 = vcmp.gt.s32.totalorder %v168, 0
    %v170 = vsel %vm169, %v168, 0
    %v171 = vshrl.u32 %v170, 5
    %v172 = vand.u32 %v170, 31
    %v173 = vsub.s32 32, %v172
    %v174 = vshrl.u32 683565275, %v173
    %v175 = vshll.u32 683565275, %v172
    %v176 = vshrl.u32 2475754826, %v173
    %v177 = vor.u32 %v175, %v176
    %v178 = vshll.u32 2475754826, %v172
    %v179 = vshrl.u32 2131351028, %v173
    %v180 = vor.u32 %v178, %v179
    %v181 = vshll.u32 2131351028, %v172
    %v182 = vshrl.u32 2102212464, %v173
    %v183 = vor.u32 %v181, %v182
    %v184 = vshll.u32 2102212464, %v172
    %v185 = vshrl.u32 920167782, %v173
    %v186 = vor.u32 %v184, %v185
    %v187 = vshll.u32 920167782, %v172
    %v188 = vshrl.u32 1326507024, %v173
    %v189 = vor.u32 %v187, %v188
    %vm190 = vcmp.lt.s32.totalorder %v171, 1
    %vm191 = vcmp.lt.s32.totalorder %v171, 2
    %vm192 = vcmp.lt.s32.totalorder %v171, 3
    %vm193 = vcmp.lt.s32.totalorder %v171, 4
    %v194 = vsel %vm190, %v174, %v177
    %v195 = vsel %vm193, %v183, 2102212464
    %v196 = vsel %vm192, %v180, %v195
    %v197 = vsel %vm191, %v194, %v196
    %v198 = vsel %vm190, %v177, %v180
    %v199 = vsel %vm193, %v186, 920167782
    %v200 = vsel %vm192, %v183, %v199
    %v201 = vsel %vm191, %v198, %v200
    %v202 = vsel %vm190, %v180, %v183
    %v203 = vsel %vm193, %v189, 1326507024
    %v204 = vsel %vm192, %v186, %v203
    %v205 = vsel %vm191, %v202, %v204
    %v206 = vshll.u32 %v166, 8
    %v207 = vmul.u32.u64.compose %v206, %v205
    %v208 = vextract.low.u32 %v207
    %v209 = vextract.high.u32 %v207
    %v210 = vmul.u32.u64.compose %v206, %v201
    %v211 = vextract.low.u32 %v210
    %v212 = vextract.high.u32 %v210
    %v213 = vmul.u32 %v206, %v197
    %v214 = vadd.s32 %v209, %v211
    %vm215 = vc.u32 %v209, %v211
    %v216 = vadd.s32 %v212, 1
    %v217 = vsel %vm215, %v216, %v212
    %v218 = vadd.s32 %v213, %v217
    %v219 = vadd.s32 %v218, 536870912
    %v220 = vshrl.u32 %v219, 30
    %v221 = vshll.u32 %v220, 30
    %v222 = vsub.s32 %v218, %v221
    %vm223 = vcmp.lt.s32.totalorder %v222, 0
    %v224 = vsub.s32 0, %v222
    %v225 = vsel %vm223, %v224, %v222
    %v226 = vclz %v225
    %v227 = vsub.s32 %v226, 2
    %vm228 = vcmp.gt.s32.totalorder 0, %v227
    %v229 = vsel %vm228, 0, %v227
    %v230 = vsub.s32 32, %v229
    %v231 = vshll.u32 %v222, %v229
    %v232 = vshrl.u32 %v214, %v230
    %v233 = vor.u32 %v231, %v232
    %v234 = vsub.s32 4294967266, %v229
    %v235 = vadd.s32 %v234, 127
    %v236 = vshll.u32 %v235, 23
    %v237 = vor.u32 4788187, %v236
    %v238 = vand.u32 2147483647, %v237
    %v240 = vcvt.s32.f32 %v233
    %v241 = vmul.f32 %v240, %v238
    %v242 = vxor.u32 %v241, 2147483648
    %v243 = vsel %vm160, %v242, %v241
    %v244 = vsub.s32 4, %v220
    %v245 = vsel %vm160, %v244, %v220
    %v246 = vsel %vm159, %v154, %v243
    %v247 = vsel %vm159, 0, %v245
    %v248 = vcosq.f32.pop %v246
    %v249 = vsinq.f32.pop %v246
    %vm250 = vweird.f32 %v154
    %v251 = vand.u32 %v247, 3
    %vm252 = vcmp.lt.s32.totalorder %v251, 2
    %vm253 = vcmp.eq.s32.totalorder %v251, 0
    %v254 = vxor.u32 %v249, 2147483648
    %v255 = vsel %vm253, %v248, %v254
    %vm256 = vcmp.eq.s32.totalorder %v251, 2
    %v257 = vxor.u32 %v248, 2147483648
    %v258 = vsel %vm256, %v257, %v249
    %v259 = vsel %vm252, %v255, %v258
    %v260 = vsel %vm250, nan, %v259
    %v261 = vand.u32 2147483647, %v156
    %vm262 = vcmp.le.f32.partialorder %v261, 0.7853982
    %vm263 = vcmp.lt.s32.totalorder %v156, 0
    %v264 = vand.u32 %v156, 2139095040
    %v265 = vshrl.u32 %v264, 23
    %v266 = vsub.s32 %v265, 127
    %v267 = vand.u32 2147483647, %v156
    %v268 = vand.u32 %v267, 8388607
    %v269 = vor.u32 %v268, 8388608
    %v270 = vsub.s32 0, %v269
    %v271 = vadd.s32 %v266, 1
    %vm272 = vcmp.gt.s32.totalorder %v271, 0
    %v273 = vsel %vm272, %v271, 0
    %v274 = vshrl.u32 %v273, 5
    %v275 = vand.u32 %v273, 31
    %v276 = vsub.s32 32, %v275
    %v277 = vshrl.u32 683565275, %v276
    %v278 = vshll.u32 683565275, %v275
    %v279 = vshrl.u32 2475754826, %v276
    %v280 = vor.u32 %v278, %v279
    %v281 = vshll.u32 2475754826, %v275
    %v282 = vshrl.u32 2131351028, %v276
    %v283 = vor.u32 %v281, %v282
    %v284 = vshll.u32 2131351028, %v275
    %v285 = vshrl.u32 2102212464, %v276
    %v286 = vor.u32 %v284, %v285
    %v287 = vshll.u32 2102212464, %v275
    %v288 = vshrl.u32 920167782, %v276
    %v289 = vor.u32 %v287, %v288
    %v290 = vshll.u32 920167782, %v275
    %v291 = vshrl.u32 1326507024, %v276
    %v292 = vor.u32 %v290, %v291
    %vm293 = vcmp.lt.s32.totalorder %v274, 1
    %vm294 = vcmp.lt.s32.totalorder %v274, 2
    %vm295 = vcmp.lt.s32.totalorder %v274, 3
    %vm296 = vcmp.lt.s32.totalorder %v274, 4
    %v297 = vsel %vm293, %v277, %v280
    %v298 = vsel %vm296, %v286, 2102212464
    %v299 = vsel %vm295, %v283, %v298
    %v300 = vsel %vm294, %v297, %v299
    %v301 = vsel %vm293, %v280, %v283
    %v302 = vsel %vm296, %v289, 920167782
    %v303 = vsel %vm295, %v286, %v302
    %v304 = vsel %vm294, %v301, %v303
    %v305 = vsel %vm293, %v283, %v286
    %v306 = vsel %vm296, %v292, 1326507024
    %v307 = vsel %vm295, %v289, %v306
    %v308 = vsel %vm294, %v305, %v307
    %v309 = vshll.u32 %v269, 8
    %v310 = vmul.u32.u64.compose %v309, %v308
    %v311 = vextract.low.u32 %v310
    %v312 = vextract.high.u32 %v310
    %v313 = vmul.u32.u64.compose %v309, %v304
    %v314 = vextract.low.u32 %v313
    %v315 = vextract.high.u32 %v313
    %v316 = vmul.u32 %v309, %v300
    %v317 = vadd.s32 %v312, %v314
    %vm318 = vc.u32 %v312, %v314
    %v319 = vadd.s32 %v315, 1
    %v320 = vsel %vm318, %v319, %v315
    %v321 = vadd.s32 %v316, %v320
    %v322 = vadd.s32 %v321, 536870912
    %v323 = vshrl.u32 %v322, 30
    %v324 = vshll.u32 %v323, 30
    %v325 = vsub.s32 %v321, %v324
    %vm326 = vcmp.lt.s32.totalorder %v325, 0
    %v327 = vsub.s32 0, %v325
    %v328 = vsel %vm326, %v327, %v325
    %v329 = vclz %v328
    %v330 = vsub.s32 %v329, 2
    %vm331 = vcmp.gt.s32.totalorder 0, %v330
    %v332 = vsel %vm331, 0, %v330
    %v333 = vsub.s32 32, %v332
    %v334 = vshll.u32 %v325, %v332
    %v335 = vshrl.u32 %v317, %v333
    %v336 = vor.u32 %v334, %v335
    %v337 = vsub.s32 4294967266, %v332
    %v338 = vadd.s32 %v337, 127
    %v339 = vshll.u32 %v338, 23
    %v340 = vor.u32 4788187, %v339
    %v341 = vand.u32 2147483647, %v340
    %v343 = vcvt.s32.f32 %v336
    %v344 = vmul.f32 %v343, %v341
    %v345 = vxor.u32 %v344, 2147483648
    %v346 = vsel %vm263, %v345, %v344
    %v347 = vsub.s32 4, %v323
    %v348 = vsel %vm263, %v347, %v323
    %v349 = vsel %vm262, %v156, %v346
    %v350 = vsel %vm262, 0, %v348
    %v351 = vcosq.f32.pop %v349
    %v352 = vsinq.f32.pop %v349
    %vm353 = vweird.f32 %v156
    %v354 = vand.u32 %v350, 3
    %vm355 = vcmp.lt.s32.totalorder %v354, 2
    %vm356 = vcmp.eq.s32.totalorder %v354, 0
    %v357 = vxor.u32 %v352, 2147483648
    %v358 = vsel %vm356, %v351, %v357
    %vm359 = vcmp.eq.s32.totalorder %v354, 2
    %v360 = vxor.u32 %v351, 2147483648
    %v361 = vsel %vm359, %v360, %v352
    %v362 = vsel %vm355, %v358, %v361
    %v363 = vsel %vm353, nan, %v362
    %v364 = vld [vmem:[#allocation7] sm:$0xff]
    %v365 = vld [vmem:[#allocation7 + $0x8] sm:$0xff]
    %v366 = vld [vmem:[#allocation7 + $0x10] sm:$0xff]
    %v367 = vld [vmem:[#allocation7 + $0x18] sm:$0xff]
    %v368 = vld [vmem:[#allocation7 + $0x20] sm:$0xff]
    %v369 = vld [vmem:[#allocation7 + $0x28] sm:$0xff]
    %v370 = vld [vmem:[#allocation7 + $0x30] sm:$0xff]
    %v371 = vld [vmem:[#allocation7 + $0x38] sm:$0xff]
    %v372 = vld [vmem:[#allocation7 + $0x40] sm:$0xff]
    %v373 = vld [vmem:[#allocation7 + $0x48] sm:$0xff]
    %v374 = vld [vmem:[#allocation7 + $0x50] sm:$0xff]
    %v375 = vld [vmem:[#allocation7 + $0x58] sm:$0xff]
    %v376 = vld [vmem:[#allocation7 + $0x60] sm:$0xff]
    %v377 = vld [vmem:[#allocation7 + $0x68] sm:$0xff]
    %v378 = vld [vmem:[#allocation7 + $0x70] sm:$0xff]
    %v379 = vld [vmem:[#allocation7 + $0x78] sm:$0xff]
    %v380 = vld [vmem:[#allocation7 + $0x80] sm:$0xff]
    %v381 = vld [vmem:[#allocation7 + $0x88] sm:$0xff]
    %v382 = vld [vmem:[#allocation7 + $0x90] sm:$0xff]
    %v383 = vld [vmem:[#allocation7 + $0x98] sm:$0xff]
    %v384 = vld [vmem:[#allocation7 + $0xa0] sm:$0xff]
    %v385 = vld [vmem:[#allocation7 + $0xa8] sm:$0xff]
    %v386 = vld [vmem:[#allocation7 + $0xb0] sm:$0xff]
    %v387 = vld [vmem:[#allocation7 + $0xb8] sm:$0xff]
    %v388 = vld [vmem:[#allocation7 + $0xc0] sm:$0xff]
    %v389 = vld [vmem:[#allocation7 + $0xc8] sm:$0xff]
    %v390 = vld [vmem:[#allocation7 + $0xd0] sm:$0xff]
    %v391 = vld [vmem:[#allocation7 + $0xd8] sm:$0xff]
    %v392 = vld [vmem:[#allocation7 + $0xe0] sm:$0xff]
    %v393 = vld [vmem:[#allocation7 + $0xe8] sm:$0xff]
    %v394 = vld [vmem:[#allocation7 + $0xf0] sm:$0xff]
    %v395 = vld [vmem:[#allocation7 + $0xf8] sm:$0xff]
    %396 = vmatprep.subr.mxu0 0.0
    %397 = vmatpush1.msra.mxu0 %v364
    %398 = vmatprep.subr.mxu0 0.0
    %399 = vmatpush1.msra.mxu0 %v365
    %400 = vmatprep.subr.mxu0 0.0
    %401 = vmatpush1.msra.mxu0 %v366
    %402 = vmatprep.subr.mxu0 0.0
    %403 = vmatpush1.msra.mxu0 %v367
    %404 = vmatprep.subr.mxu0 0.0
    %405 = vmatpush1.msra.mxu0 %v368
    %406 = vmatprep.subr.mxu0 0.0
    %407 = vmatpush1.msra.mxu0 %v369
    %408 = vmatprep.subr.mxu0 0.0
    %409 = vmatpush1.msra.mxu0 %v370
    %410 = vmatprep.subr.mxu0 0.0
    %411 = vmatpush1.msra.mxu0 %v371
    %412 = vmatprep.subr.mxu0 0.0
    %413 = vmatpush1.msra.mxu0 %v372
    %414 = vmatprep.subr.mxu0 0.0
    %415 = vmatpush1.msra.mxu0 %v373
    %416 = vmatprep.subr.mxu0 0.0
    %417 = vmatpush1.msra.mxu0 %v374
    %418 = vmatprep.subr.mxu0 0.0
    %419 = vmatpush1.msra.mxu0 %v375
    %420 = vmatprep.subr.mxu0 0.0
    %421 = vmatpush1.msra.mxu0 %v376
    %422 = vmatprep.subr.mxu0 0.0
    %423 = vmatpush1.msra.mxu0 %v377
    %424 = vmatprep.subr.mxu0 0.0
    %425 = vmatpush1.msra.mxu0 %v378
    %426 = vmatprep.subr.mxu0 0.0
    %427 = vmatpush1.msra.mxu0 %v379
    %428 = vmatprep.subr.mxu0 0.0
    %429 = vmatpush1.msra.mxu0 %v380
    %430 = vmatprep.subr.mxu0 0.0
    %431 = vmatpush1.msra.mxu0 %v381
    %432 = vmatprep.subr.mxu0 0.0
    %433 = vmatpush1.msra.mxu0 %v382
    %434 = vmatprep.subr.mxu0 0.0
    %435 = vmatpush1.msra.mxu0 %v383
    %436 = vmatprep.subr.mxu0 0.0
    %437 = vmatpush1.msra.mxu0 %v384
    %438 = vmatprep.subr.mxu0 0.0
    %439 = vmatpush1.msra.mxu0 %v385
    %440 = vmatprep.subr.mxu0 0.0
    %441 = vmatpush1.msra.mxu0 %v386
    %442 = vmatprep.subr.mxu0 0.0
    %443 = vmatpush1.msra.mxu0 %v387
    %444 = vmatprep.subr.mxu0 0.0
    %445 = vmatpush1.msra.mxu0 %v388
    %446 = vmatprep.subr.mxu0 0.0
    %447 = vmatpush1.msra.mxu0 %v389
    %448 = vmatprep.subr.mxu0 0.0
    %449 = vmatpush1.msra.mxu0 %v390
    %450 = vmatprep.subr.mxu0 0.0
    %451 = vmatpush1.msra.mxu0 %v391
    %452 = vmatprep.subr.mxu0 0.0
    %453 = vmatpush1.msra.mxu0 %v392
    %454 = vmatprep.subr.mxu0 0.0
    %455 = vmatpush1.msra.mxu0 %v393
    %456 = vmatprep.subr.mxu0 0.0
    %457 = vmatpush1.msra.mxu0 %v394
    %458 = vmatprep.subr.mxu0 0.0
    %459 = vmatpush1.msra.mxu0 %v395
    %460 = vmatprep.mubr.f32.mxu0 %v363
    %461 = vmatmul.mubr.f32.gmra.mrb[0].mxu0 %v260
    %v462 = vpop.f32.mrb[0].mxu0
    %v463 = vadd.f32 0.0, %v462
    %v464 = vpop.f32.mrb[0].mxu0
    %465 = vdwg.mxu0
    %466 = vst [vmem:[#allocation8] sm:$0x3] %v463
    // Predicated region
    $region26: #{tpu_custom_call.1} parent=1 // pred_check
      _
    $region27: #{tpu_custom_call.1} parent=1 // pred_check_branch
      %468 = sbr.rel (0) target = $region29
    $region28: #{tpu_custom_call.1} parent=1 // pred_region
      %s470 = ssub.s32 32, 32
      %471 = vsyncadd [#allocation4], %s470
      %s473 = sshll.u32 [#allocation8], 4
      %s474 = int_to_ptr.vmem [resolvable:$true] %s473
      %476 = dma.vmem_to_hbm [thread:$0]  %s474, 32, %s3, [#allocation4]
    $region29: #{tpu_custom_call.1} parent=1 // pred_fallthru
      _
    // Predicated region
    $region30: #{tpu_custom_call.1} parent=1 // pred_check
      _
    $region31: #{tpu_custom_call.1} parent=1 // pred_check_branch
      %478 = sbr.rel (0) target = $region33
    $region32: #{tpu_custom_call.1} parent=1 // pred_region
      %479 = dma.done [#allocation4], 32
    $region33: #{tpu_custom_call.1} parent=1 // pred_fallthru
      _
    %480 = vsyncpa [#allocation3], 1
    %481 = vsyncpa [#allocation6], 1
    %482 = vsyncpa [#allocation4], 1

</llo_original>
